<compile_context>
chip_gen: v7x
topology: tpu7x:2x2x1
jax: 0.10.0
libtpu: 0.0.40
codegen_flags: <defaults>
</compile_context>

<pallas_src>
import jax
import jax.numpy as jnp
from jax import lax
from jax.experimental import pallas as pl
from jax.experimental.pallas import tpu as pltpu


_LANE = 128
_VMEM_LIMIT = 32 * 1024 * 1024  # safe on v7x (64 MiB physical / 32 MiB scoped)


def _round_up(x, m):
    return ((x + m - 1) // m) * m


def _pick_tiles(M, Np, K):
    """Tile sizes: M in sublane multiples, N/K lane-dense multiples of 128."""
    tm = 256 if M >= 256 else _round_up(max(M, 8), 8)
    tn = 256 if (Np % 256 == 0) else 128
    tk = 384 if (K % 384 == 0) else 128
    return tm, tn, tk


# ----------------------------- Pallas kernels -----------------------------

def _bn_relu_kernel(x_ref, s_ref, b_ref, o_ref):
    # relu(x * scale + bias); x: [tm, C], scale/bias: [1, C]
    o_ref[...] = jnp.maximum(
        x_ref[...].astype(jnp.float32) * s_ref[...] + b_ref[...], 0.0
    ).astype(o_ref.dtype)


def _mm_bn_relu_kernel(a_ref, b_ref, s_ref, bias_ref, o_ref, acc_ref):
    # out = relu((A @ B) * scale + bias), K-accumulated in VMEM f32 scratch.
    @pl.when(pl.program_id(2) == 0)
    def _():
        acc_ref[...] = jnp.zeros_like(acc_ref)

    acc_ref[...] += jnp.dot(a_ref[...], b_ref[...],
                            preferred_element_type=jnp.float32)

    @pl.when(pl.program_id(2) == pl.num_programs(2) - 1)
    def _():
        o_ref[...] = jnp.maximum(
            acc_ref[...] * s_ref[...] + bias_ref[...], 0.0
        ).astype(o_ref.dtype)


def _mm_add_res_kernel(a_ref, b_ref, r_ref, o_ref, acc_ref):
    # out = (A @ B) + residual (identity shortcut fused into the accumulator).
    @pl.when(pl.program_id(2) == 0)
    def _():
        acc_ref[...] = r_ref[...].astype(jnp.float32)

    acc_ref[...] += jnp.dot(a_ref[...], b_ref[...],
                            preferred_element_type=jnp.float32)

    @pl.when(pl.program_id(2) == pl.num_programs(2) - 1)
    def _():
        o_ref[...] = acc_ref[...].astype(o_ref.dtype)


def _mm_add_sc_kernel(a_ref, b_ref, xs_ref, wsc_ref, o_ref, acc_ref):
    # out = (A @ B) + (Xs @ Wsc): 1x1 shortcut conv fused as a second dot.
    @pl.when(pl.program_id(2) == 0)
    def _():
        acc_ref[...] = jnp.dot(xs_ref[...], wsc_ref[...],
                               preferred_element_type=jnp.float32)

    acc_ref[...] += jnp.dot(a_ref[...], b_ref[...],
                            preferred_element_type=jnp.float32)

    @pl.when(pl.program_id(2) == pl.num_programs(2) - 1)
    def _():
        o_ref[...] = acc_ref[...].astype(o_ref.dtype)


# --------------------------- pallas_call wrappers ---------------------------

def bn_relu(x2d, scale, bias, out_dtype):
    M, C = x2d.shape
    tm = 256 if M >= 256 else _round_up(max(M, 8), 8)
    Mp = _round_up(M, tm)
    if Mp != M:
        x2d = jnp.pad(x2d, ((0, Mp - M), (0, 0)))
    out = pl.pallas_call(
        _bn_relu_kernel,
        out_shape=jax.ShapeDtypeStruct((Mp, C), out_dtype),
        grid_spec=pltpu.PrefetchScalarGridSpec(
            num_scalar_prefetch=0,
            grid=(Mp // tm,),
            in_specs=[pl.BlockSpec((tm, C), lambda i: (i, 0)),
                      pl.BlockSpec((1, C), lambda i: (0, 0)),
                      pl.BlockSpec((1, C), lambda i: (0, 0))],
            out_specs=pl.BlockSpec((tm, C), lambda i: (i, 0)),
        ),
        compiler_params=pltpu.CompilerParams(
            dimension_semantics=("parallel",),
            vmem_limit_bytes=_VMEM_LIMIT),
    )(x2d, scale.reshape(1, C), bias.reshape(1, C))
    return out[:M]


def conv_matmul_bn_relu(a, b, scale, bias, out_dtype):
    """relu(bn(A @ B)) with BN folded as scale/bias applied in the epilogue."""
    M, K = a.shape
    _, Np = b.shape
    tm, tn, tk = _pick_tiles(M, Np, K)
    Mp = _round_up(M, tm)
    if Mp != M:
        a = jnp.pad(a, ((0, Mp - M), (0, 0)))
    grid = (Mp // tm, Np // tn, K // tk)
    out = pl.pallas_call(
        _mm_bn_relu_kernel,
        out_shape=jax.ShapeDtypeStruct((Mp, Np), out_dtype),
        grid_spec=pltpu.PrefetchScalarGridSpec(
            num_scalar_prefetch=0,
            grid=grid,
            in_specs=[
                pl.BlockSpec((tm, tk), lambda i, j, k: (i, k)),
                pl.BlockSpec((tk, tn), lambda i, j, k: (k, j)),
                pl.BlockSpec((1, tn), lambda i, j, k: (0, j)),
                pl.BlockSpec((1, tn), lambda i, j, k: (0, j)),
            ],
            out_specs=pl.BlockSpec((tm, tn), lambda i, j, k: (i, j)),
            scratch_shapes=[pltpu.VMEM((tm, tn), jnp.float32)],
        ),
        compiler_params=pltpu.CompilerParams(
            dimension_semantics=("parallel", "parallel", "arbitrary"),
            vmem_limit_bytes=_VMEM_LIMIT),
    )(a, b, scale.reshape(1, Np), bias.reshape(1, Np))
    return out[:M]


def conv_matmul_add_res(a, b, r):
    """(A @ B) + residual tensor (identity shortcut)."""
    M, K = a.shape
    _, Np = b.shape
    tm, tn, tk = _pick_tiles(M, Np, K)
    Mp = _round_up(M, tm)
    if Mp != M:
        a = jnp.pad(a, ((0, Mp - M), (0, 0)))
        r = jnp.pad(r, ((0, Mp - M), (0, 0)))
    grid = (Mp // tm, Np // tn, K // tk)
    out = pl.pallas_call(
        _mm_add_res_kernel,
        out_shape=jax.ShapeDtypeStruct((Mp, Np), jnp.float32),
        grid_spec=pltpu.PrefetchScalarGridSpec(
            num_scalar_prefetch=0,
            grid=grid,
            in_specs=[
                pl.BlockSpec((tm, tk), lambda i, j, k: (i, k)),
                pl.BlockSpec((tk, tn), lambda i, j, k: (k, j)),
                pl.BlockSpec((tm, tn), lambda i, j, k: (i, j)),
            ],
            out_specs=pl.BlockSpec((tm, tn), lambda i, j, k: (i, j)),
            scratch_shapes=[pltpu.VMEM((tm, tn), jnp.float32)],
        ),
        compiler_params=pltpu.CompilerParams(
            dimension_semantics=("parallel", "parallel", "arbitrary"),
            vmem_limit_bytes=_VMEM_LIMIT),
    )(a, b, r)
    return out[:M]


def conv_matmul_add_shortcut(a, b, xs, wsc):
    """(A @ B) + (Xs @ Wsc): conv2 with the 1x1 shortcut conv fused in."""
    M, K = a.shape
    _, Np = b.shape
    Ksc = wsc.shape[0]
    tm, tn, tk = _pick_tiles(M, Np, K)
    Mp = _round_up(M, tm)
    if Mp != M:
        a = jnp.pad(a, ((0, Mp - M), (0, 0)))
        xs = jnp.pad(xs, ((0, Mp - M), (0, 0)))
    grid = (Mp // tm, Np // tn, K // tk)
    out = pl.pallas_call(
        _mm_add_sc_kernel,
        out_shape=jax.ShapeDtypeStruct((Mp, Np), jnp.float32),
        grid_spec=pltpu.PrefetchScalarGridSpec(
            num_scalar_prefetch=0,
            grid=grid,
            in_specs=[
                pl.BlockSpec((tm, tk), lambda i, j, k: (i, k)),
                pl.BlockSpec((tk, tn), lambda i, j, k: (k, j)),
                pl.BlockSpec((tm, Ksc), lambda i, j, k: (i, 0)),
                pl.BlockSpec((Ksc, tn), lambda i, j, k: (0, j)),
            ],
            out_specs=pl.BlockSpec((tm, tn), lambda i, j, k: (i, j)),
            scratch_shapes=[pltpu.VMEM((tm, tn), jnp.float32)],
        ),
        compiler_params=pltpu.CompilerParams(
            dimension_semantics=("parallel", "parallel", "arbitrary"),
            vmem_limit_bytes=_VMEM_LIMIT),
    )(a, b, xs, wsc)
    return out[:M]


# ------------------------------ JAX glue ----------------------------------

def _im2col3x3(x, stride):
    """x: [N, H, W, C] (C already lane-padded), 3x3 / pad 1 -> [N*Ho*Wo, 9*C]."""
    N, H, W, C = x.shape
    xp = jnp.pad(x, ((0, 0), (1, 1), (1, 1), (0, 0)))
    Ho = (H + 2 - 3) // stride + 1
    Wo = (W + 2 - 3) // stride + 1
    cols = []
    for kh in range(3):
        for kw in range(3):
            cols.append(
                xp[:, kh:kh + stride * (Ho - 1) + 1:stride,
                      kw:kw + stride * (Wo - 1) + 1:stride, :])
    patches = jnp.concatenate(cols, axis=-1)  # [N, Ho, Wo, 9*C]
    return patches.reshape(N * Ho * Wo, 9 * C), (N, Ho, Wo)


def _conv_w_to_mat(w, cin_pad, cout_pad):
    """[Cout, Cin, kh, kw] (PyTorch) -> zero-padded [kh*kw*cin_pad, cout_pad]."""
    Cout, Cin, kh, kw = w.shape
    wp = jnp.pad(w, ((0, cout_pad - Cout), (0, cin_pad - Cin), (0, 0), (0, 0)))
    return jnp.transpose(wp, (2, 3, 1, 0)).reshape(kh * kw * cin_pad, cout_pad)


def basic_block_forward_nhwc(x_nhwc, params, stride, equal_in_out,
                             compute_dtype=jnp.float32):
    eps = 1e-5
    x = x_nhwc.astype(jnp.float32)
    N, H, W, Cin = x.shape
    Cout = params["conv1_w"].shape[0]
    Cin_p = _round_up(Cin, _LANE)
    Cout_p = _round_up(Cout, _LANE)

    # channel-pad the input once (lane-dense layout for every kernel)
    xp = jnp.pad(x, ((0, 0), (0, 0), (0, 0), (0, Cin_p - Cin)))

    # --- bn1 + relu1 (single tiled elementwise pass; feeds conv1 & shortcut) ---
    s1 = params["bn1_gamma"] / jnp.sqrt(params["bn1_var"] + eps)
    b1 = params["bn1_beta"] - params["bn1_mean"] * s1
    s1p = jnp.pad(s1, (0, Cin_p - Cin))
    b1p = jnp.pad(b1, (0, Cin_p - Cin))
    a1 = bn_relu(xp.reshape(N * H * W, Cin_p), s1p, b1p,
                 compute_dtype).reshape(N, H, W, Cin_p)

    # --- conv1 (3x3, stride, pad 1) fused with bn2 + relu2 ---
    p1, (_, Ho, Wo) = _im2col3x3(a1, stride)
    w1 = _conv_w_to_mat(params["conv1_w"], Cin_p, Cout_p).astype(compute_dtype)
    s2 = params["bn2_gamma"] / jnp.sqrt(params["bn2_var"] + eps)
    b2 = params["bn2_beta"] - params["bn2_mean"] * s2
    s2p = jnp.pad(s2, (0, Cout_p - Cout))
    b2p = jnp.pad(b2, (0, Cout_p - Cout))
    a2 = conv_matmul_bn_relu(p1, w1, s2p, b2p, compute_dtype)  # [N*Ho*Wo, Cout_p]

    # droprate == 0.0 -> no-op.

    # --- conv2 (3x3, stride 1, pad 1) fused with the residual branch ---
    p2, _ = _im2col3x3(a2.reshape(N, Ho, Wo, Cout_p), 1)
    w2 = _conv_w_to_mat(params["conv2_w"], Cout_p, Cout_p).astype(compute_dtype)

    if equal_in_out:
        # identity shortcut uses the ORIGINAL x; only valid when stride == 1
        assert stride == 1, "identity shortcut requires stride == 1"
        residual = xp.reshape(N * Ho * Wo, Cout_p)          # Cin_p == Cout_p
        out = conv_matmul_add_res(p2, w2, residual)
    else:
        # convShortcut(relu1(bn1(x))): 1x1 conv, stride, no pad — fused in-kernel
        xs = a1[:, ::stride, ::stride, :].reshape(N * Ho * Wo, Cin_p)
        wsc = _conv_w_to_mat(params["convsc_w"], Cin_p, Cout_p).astype(compute_dtype)
        out = conv_matmul_add_shortcut(p2, w2, xs, wsc)

    return out.reshape(N, Ho, Wo, Cout_p)[..., :Cout]


def basic_block_forward(x_nchw, params, stride, equal_in_out,
                        compute_dtype=jnp.float32):
    # NCHW boundary for PyTorch parity; in a stacked WRN call the NHWC entry
    # point directly so these transposes happen once per network, not per block.
    x = jnp.transpose(x_nchw, (0, 2, 3, 1))
    out = basic_block_forward_nhwc(x, params, stride, equal_in_out, compute_dtype)
    return jnp.transpose(out, (0, 3, 1, 2))


# --------------------------- pure-JAX reference ----------------------------

def _reference_forward(x_nchw, params, stride, equal_in_out):
    eps = 1e-5

    def bn(x, g, b, m, v):
        s = g / jnp.sqrt(v + eps)
        return x * s[None, :, None, None] + (b - m * s)[None, :, None, None]

    def conv(x, w, stride, pad):
        return lax.conv_general_dilated(
            x, w, (stride, stride), [(pad, pad), (pad, pad)],
            dimension_numbers=("NCHW", "OIHW", "NCHW"))

    a1 = jax.nn.relu(bn(x_nchw, params["bn1_gamma"], params["bn1_beta"],
                        params["bn1_mean"], params["bn1_var"]))
    c1 = conv(a1, params["conv1_w"], stride, 1)
    a2 = jax.nn.relu(bn(c1, params["bn2_gamma"], params["bn2_beta"],
                        params["bn2_mean"], params["bn2_var"]))
    c2 = conv(a2, params["conv2_w"], 1, 1)
    if equal_in_out:
        res = x_nchw
    else:
        res = conv(a1, params["convsc_w"], stride, 0)
    return res + c2


# --------------------------------- main ------------------------------------

def _make_params(key, in_planes, out_planes):
    ks = jax.random.split(key, 11)
    return {
        "bn1_gamma": 0.5 + jax.random.uniform(ks[0], (in_planes,), jnp.float32),
        "bn1_beta": 0.1 * jax.random.normal(ks[1], (in_planes,), jnp.float32),
        "bn1_mean": 0.1 * jax.random.normal(ks[2], (in_planes,), jnp.float32),
        "bn1_var": 0.5 + jax.random.uniform(ks[3], (in_planes,), jnp.float32),
        "conv1_w": 0.1 * jax.random.normal(ks[4], (out_planes, in_planes, 3, 3), jnp.float32),
        "bn2_gamma": 0.5 + jax.random.uniform(ks[5], (out_planes,), jnp.float32),
        "bn2_beta": 0.1 * jax.random.normal(ks[6], (out_planes,), jnp.float32),
        "bn2_mean": 0.1 * jax.random.normal(ks[7], (out_planes,), jnp.float32),
        "bn2_var": 0.5 + jax.random.uniform(ks[8], (out_planes,), jnp.float32),
        "conv2_w": 0.1 * jax.random.normal(ks[9], (out_planes, out_planes, 3, 3), jnp.float32),
        "convsc_w": 0.1 * jax.random.normal(ks[10], (out_planes, in_planes, 1, 1), jnp.float32),
    }


if __name__ == "__main__":
    key = jax.random.PRNGKey(0)
    kp1, kx1, kp2, kx2 = jax.random.split(key, 4)

    # --- Case 1: in != out planes, stride 2 -> fused 1x1-conv shortcut path ---
    in_planes, out_planes, stride = 4, 8, 2
    N, H, W = 2, 16, 16
    params = _make_params(kp1, in_planes, out_planes)
    x = jax.random.normal(kx1, (N, in_planes, H, W), jnp.float32)

    out = jax.block_until_ready(basic_block_forward(x, params, stride, False))
    ref = jax.block_until_ready(_reference_forward(x, params, stride, False))
    assert out.shape == (N, out_planes, H // stride, W // stride), out.shape
    assert jnp.allclose(out, ref, atol=1e-4, rtol=1e-4), \
        float(jnp.max(jnp.abs(out - ref)))

    # bf16 MXU inputs (v6e/v7x recommendation), f32 accumulation.
    out_bf16 = jax.block_until_ready(
        basic_block_forward(x, params, stride, False, compute_dtype=jnp.bfloat16))
    assert jnp.allclose(out_bf16, ref, atol=5e-2, rtol=5e-2), \
        float(jnp.max(jnp.abs(out_bf16 - ref)))

    # --- Case 2: equal in/out planes, stride 1 -> identity-residual path ---
    params2 = _make_params(kp2, 8, 8)
    x2 = jax.random.normal(kx2, (2, 8, 16, 16), jnp.float32)
    out2 = jax.block_until_ready(basic_block_forward(x2, params2, 1, True))
    ref2 = jax.block_until_ready(_reference_forward(x2, params2, 1, True))
    assert out2.shape == (2, 8, 16, 16), out2.shape
    assert jnp.allclose(out2, ref2, atol=1e-4, rtol=1e-4), \
        float(jnp.max(jnp.abs(out2 - ref2)))

    print("KERNEL_OK")
</pallas_src>

<mosaic_0001>
module attributes {stable_mosaic.version = 11 : i64} {
  func.func @_bn_relu_kernel(%arg0: i32, %arg1: memref<256x128xf32, #tpu.memory_space<vmem>>, %arg2: memref<1x128xf32, #tpu.memory_space<vmem>>, %arg3: memref<1x128xf32, #tpu.memory_space<vmem>>, %arg4: memref<256x128xf32, #tpu.memory_space<vmem>>) attributes {dimension_semantics = [#tpu.dimension_semantics<parallel>], iteration_bounds = array<i64: 2>, scalar_prefetch = 0 : i64, scratch_operands = 0 : i64, tpu.core_type = #tpu.core_type<tc>, window_params = [{transform_indices = @transform_0, window_bounds = array<i64: 256, 128>}, {pipeline_mode = #tpu.pipeline_mode<synchronous>, transform_indices = @transform_1, window_bounds = array<i64: 1, 128>}, {pipeline_mode = #tpu.pipeline_mode<synchronous>, transform_indices = @transform_2, window_bounds = array<i64: 1, 128>}, {transform_indices = @transform_3, window_bounds = array<i64: 256, 128>}]} {
    %c0 = arith.constant 0 : index
    %c0_0 = arith.constant 0 : index
    %0 = vector.load %arg1[%c0, %c0_0] : memref<256x128xf32, #tpu.memory_space<vmem>>, vector<256x128xf32>
    %c0_1 = arith.constant 0 : index
    %c0_2 = arith.constant 0 : index
    %1 = vector.load %arg2[%c0_1, %c0_2] : memref<1x128xf32, #tpu.memory_space<vmem>>, vector<1x128xf32>
    %2 = vector.broadcast %1 : vector<1x128xf32> to vector<256x128xf32>
    %3 = arith.mulf %0, %2 : vector<256x128xf32>
    %c0_3 = arith.constant 0 : index
    %c0_4 = arith.constant 0 : index
    %4 = vector.load %arg3[%c0_3, %c0_4] : memref<1x128xf32, #tpu.memory_space<vmem>>, vector<1x128xf32>
    %5 = vector.broadcast %4 : vector<1x128xf32> to vector<256x128xf32>
    %6 = arith.addf %3, %5 : vector<256x128xf32>
    %cst = arith.constant 0.000000e+00 : f32
    %7 = vector.broadcast %cst : f32 to vector<256x128xf32>
    %8 = arith.maximumf %6, %7 : vector<256x128xf32>
    %c0_5 = arith.constant 0 : index
    %c0_6 = arith.constant 0 : index
    %9 = vector.load %arg4[%c0_5, %c0_6] : memref<256x128xf32, #tpu.memory_space<vmem>>, vector<256x128xf32>
    tpu.vector_store %arg4[%c0_5, %c0_6], %8 {strides = array<i32>} : memref<256x128xf32, #tpu.memory_space<vmem>>, vector<256x128xf32>,
    return
  }
  func.func @transform_0(%arg0: i32) -> (i32, i32) {
    %c0_i32 = arith.constant 0 : i32
    %c0_i32_0 = arith.constant 0 : i32
    return %arg0, %c0_i32 : i32, i32
  }
  func.func @transform_1(%arg0: i32) -> (i32, i32) {
    %c0_i32 = arith.constant 0 : i32
    %c0_i32_0 = arith.constant 0 : i32
    %c0_i32_1 = arith.constant 0 : i32
    return %c0_i32, %c0_i32_0 : i32, i32
  }
  func.func @transform_2(%arg0: i32) -> (i32, i32) {
    %c0_i32 = arith.constant 0 : i32
    %c0_i32_0 = arith.constant 0 : i32
    %c0_i32_1 = arith.constant 0 : i32
    return %c0_i32, %c0_i32_0 : i32, i32
  }
  func.func @transform_3(%arg0: i32) -> (i32, i32) {
    %c0_i32 = arith.constant 0 : i32
    %c0_i32_0 = arith.constant 0 : i32
    return %arg0, %c0_i32 : i32, i32
  }
}

</mosaic_0001>

<llo_original>
// kernel: tpu_custom_call.1
$region0: #{tpu_custom_call.1}
  #allocation0 [shape = 'u32[]', space=smem, size = 0x4, offset = 0x4, fixed_abs, tag = 'smem constant byte address 0x4 - core index']
  #allocation1 [shape = 'u32[144,128]{1,0:T(1,128)}', space=vmem, size = 0x12000, scoped, tag = 'internal scratch']
  %s0 = inlined_call_operand.hbm [shape: f32[512,128], index: 0, kind: input, shape index: {}]
  %s1 = inlined_call_operand.vmem [shape: f32[1,128], index: 1, kind: input, shape index: {}]
  %s2 = inlined_call_operand.vmem [shape: f32[1,128], index: 2, kind: input, shape index: {}]
  %s3 = inlined_call_operand.hbm [shape: f32[512,128], index: 3, kind: output, shape index: {}]
  %s4 = sld [smem:[#allocation0]]
  $region49: #{tpu_custom_call.1} parent=0
    _
  %s6 = ssub.s32 1, %s4
  %s7 = scalar_select 0, %s6, %s4
  $region1: #{tpu_custom_call.1} parent=0
    #allocation2 [shape = 'u8[262144]{0}', space=vmem, size = 0x40000, scoped, tag = 'input window, operand 0']
    #allocation3 [shape = 's32[2]{0}', space=sflag, size = 0x8, scoped, tag = 'scoped memory for tpu_custom_call.1']
    #allocation4 [shape = 's32[2]{0}', space=sflag, size = 0x8, scoped, tag = 'scoped memory for tpu_custom_call.1']
    #allocation5 [shape = 'u8[262144]{0}', space=vmem, size = 0x40000, scoped, tag = 'output window, operand 0']
    %8 = vsyncpa [#allocation3], 0
    %s9 = scalar_lea.sflag [#allocation3], 1
    %10 = vsyncpa %s9, 0
    %11 = vsyncpa [#allocation4], 0
    %s12 = scalar_lea.sflag [#allocation4], 1
    %13 = vsyncpa %s12, 0
    loop: start=0, step=1, limit=4
    $region2: #{tpu_custom_call.1} parent=1 // loop_pre_header
      _
    $region3: #{tpu_custom_call.1} parent=1 // loop_header
      %s15 = sphi 0, %s19
      %p16 = scmp.ge.s32.totalorder %s15, 4
      %s25 = sphi 0, %s27
      %s28 = sphi 0, %s25
      %s29 = sphi 0, %s28
      %s45 = sphi 0, %s29
      %s49 = sphi 0, %s49
      %s51 = sphi 0, %s49
      %s52 = sphi 0, %s51
      %s66 = sphi 0, %s52
      %s70 = sphi 0, %s70
      %s72 = sphi 0, %s70
      %s73 = sphi 0, %s72
      %s87 = sphi 0, %s73
      %s93 = sphi 0, %s95
      %s96 = sphi 0, %s93
      %s97 = sphi 0, %s96
      %s113 = sphi 0, %s97
    $region4: #{tpu_custom_call.1} parent=1 // loop_header_branch
      %18 = sbr.rel (%p16) target = $region8
    $region5: #{tpu_custom_call.1} parent=1 // loop_body
      %s20 = ssub.s32 %s15, 1
      %s21 = ssub.s32 %s15, 2
      %s22 = sadd.s32 %s15, 1
      %s23 = ssub.s32 %s15, %s22
      %p24 = scmp.eq.s32.totalorder %s23, 0
      %s26 = sadd.s32 %s25, 1
      %s27 = scalar_select %p24, %s25, %s26
      %p30 = pneg %p24
      %p31 = scmp.eq.s32.totalorder %s15, 1
      %p32 = por %p30, %p31
      %p33 = scmp.ne.s32.totalorder %s25, %s28
      %p34 = scmp.eq.s32.totalorder %s15, 0
      %p35 = por %p33, %p34
      %p36 = scmp.ne.s32.totalorder %s25, %s28
      %p37 = scmp.eq.s32.totalorder %s20, 1
      %p38 = por %p36, %p37
      %p39 = scmp.ne.s32.totalorder %s28, %s29
      %p40 = scmp.eq.s32.totalorder %s20, 0
      %p41 = por %p39, %p40
      %p42 = scmp.ne.s32.totalorder %s28, %s29
      %p43 = scmp.eq.s32.totalorder %s21, 1
      %p44 = por %p42, %p43
      %p46 = scmp.ne.s32.totalorder %s29, %s45
      %p47 = scmp.eq.s32.totalorder %s21, 0
      %p48 = por %p46, %p47
      %s50 = sadd.s32 %s49, 1
      %p53 = scmp.eq.s32.totalorder %s15, 1
      %p54 = scmp.ne.s32.totalorder %s49, %s51
      %p55 = scmp.eq.s32.totalorder %s15, 0
      %p56 = por %p54, %p55
      %p57 = scmp.ne.s32.totalorder %s49, %s51
      %p58 = scmp.eq.s32.totalorder %s20, 1
      %p59 = por %p57, %p58
      %p60 = scmp.ne.s32.totalorder %s51, %s52
      %p61 = scmp.eq.s32.totalorder %s20, 0
      %p62 = por %p60, %p61
      %p63 = scmp.ne.s32.totalorder %s51, %s52
      %p64 = scmp.eq.s32.totalorder %s21, 1
      %p65 = por %p63, %p64
      %p67 = scmp.ne.s32.totalorder %s52, %s66
      %p68 = scmp.eq.s32.totalorder %s21, 0
      %p69 = por %p67, %p68
      %s71 = sadd.s32 %s70, 1
      %p74 = scmp.eq.s32.totalorder %s15, 1
      %p75 = scmp.ne.s32.totalorder %s70, %s72
      %p76 = scmp.eq.s32.totalorder %s15, 0
      %p77 = por %p75, %p76
      %p78 = scmp.ne.s32.totalorder %s70, %s72
      %p79 = scmp.eq.s32.totalorder %s20, 1
      %p80 = por %p78, %p79
      %p81 = scmp.ne.s32.totalorder %s72, %s73
      %p82 = scmp.eq.s32.totalorder %s20, 0
      %p83 = por %p81, %p82
      %p84 = scmp.ne.s32.totalorder %s72, %s73
      %p85 = scmp.eq.s32.totalorder %s21, 1
      %p86 = por %p84, %p85
      %p88 = scmp.ne.s32.totalorder %s73, %s87
      %p89 = scmp.eq.s32.totalorder %s21, 0
      %p90 = por %p88, %p89
      %s91 = ssub.s32 %s15, %s22
      %p92 = scmp.eq.s32.totalorder %s91, 0
      %s94 = sadd.s32 %s93, 1
      %s95 = scalar_select %p92, %s93, %s94
      %p98 = pneg %p92
      %p99 = scmp.eq.s32.totalorder %s15, 1
      %p100 = por %p98, %p99
      %p101 = scmp.ne.s32.totalorder %s93, %s96
      %p102 = scmp.eq.s32.totalorder %s15, 0
      %p103 = por %p101, %p102
      %p104 = scmp.ne.s32.totalorder %s93, %s96
      %p105 = scmp.eq.s32.totalorder %s20, 1
      %p106 = por %p104, %p105
      %p107 = scmp.ne.s32.totalorder %s96, %s97
      %p108 = scmp.eq.s32.totalorder %s20, 0
      %p109 = por %p107, %p108
      %p110 = scmp.ne.s32.totalorder %s96, %s97
      %p111 = scmp.eq.s32.totalorder %s21, 1
      %p112 = por %p110, %p111
      %p114 = scmp.ne.s32.totalorder %s97, %s113
      %p115 = scmp.eq.s32.totalorder %s21, 0
      %p116 = por %p114, %p115
      %p117 = scmp.le.s32.totalorder 1, %s15
      %p118 = scmp.lt.s32.totalorder %s15, 3
      %p119 = pnand %p117, %p118
      %p120 = pneg %p119
      // Predicated region
      $region9: #{tpu_custom_call.1} parent=5 // pred_check
        _
      $region10: #{tpu_custom_call.1} parent=5 // pred_check_branch
        %122 = sbr.rel (%p119) target = $region12
      $region11: #{tpu_custom_call.1} parent=5 // pred_region
        %s123 = ssub.s32 %s15, 1
        // Predicated region
        $region13: #{tpu_custom_call.1} parent=11 // pred_check
          %p124 = pneg %p62
        $region14: #{tpu_custom_call.1} parent=11 // pred_check_branch
          %126 = sbr.rel (%p124) target = $region16
        $region15: #{tpu_custom_call.1} parent=11 // pred_region
          _
        $region16: #{tpu_custom_call.1} parent=11 // pred_fallthru
          _
        // Predicated region
        $region17: #{tpu_custom_call.1} parent=11 // pred_check
          %p127 = pneg %p83
        $region18: #{tpu_custom_call.1} parent=11 // pred_check_branch
          %129 = sbr.rel (%p127) target = $region20
        $region19: #{tpu_custom_call.1} parent=11 // pred_region
          _
        $region20: #{tpu_custom_call.1} parent=11 // pred_fallthru
          _
      $region12: #{tpu_custom_call.1} parent=5 // pred_fallthru
        _
      %p130 = scmp.lt.s32.totalorder %s15, 2
      // Predicated region
      $region21: #{tpu_custom_call.1} parent=5 // pred_check
        %p131 = pneg %p130
      $region22: #{tpu_custom_call.1} parent=5 // pred_check_branch
        %133 = sbr.rel (%p131) target = $region24
      $region23: #{tpu_custom_call.1} parent=5 // pred_region
        // Predicated region
        $region25: #{tpu_custom_call.1} parent=23 // pred_check
          %p134 = pneg %p35
        $region26: #{tpu_custom_call.1} parent=23 // pred_check_branch
          %136 = sbr.rel (%p134) target = $region28
        $region27: #{tpu_custom_call.1} parent=23 // pred_region
          %s137 = sand.u32 %s25, 1
          %s138 = scalar_lea.sflag [#allocation3], %s137
          %s139 = sand.u32 %s25, 1
          %s140 = smul.addr %s139, 256
          %s141 = scalar_lea.vmem [#allocation2], %s140
          %s142 = smul.u32 32, %s15
          %s144 = ssub.s32 4096, 4096
          %145 = vsyncadd %s138, %s144
          %s146 = smul.addr %s142, 128
          %s147 = scalar_lea.hbm %s0, %s146
          %s148 = sshll.u32 %s141, 4
          %s149 = int_to_ptr.vmem [resolvable:$true] %s148
          %154 = dma.hbm_to_vmem [thread:$0]  %s147, 4096, %s149, %s138, 128, 128, 8
        $region28: #{tpu_custom_call.1} parent=23 // pred_fallthru
          _
      $region24: #{tpu_custom_call.1} parent=5 // pred_fallthru
        _
      %p155 = scmp.le.s32.totalorder 1, %s15
      %p156 = scmp.lt.s32.totalorder %s15, 3
      %p157 = pnand %p155, %p156
      %p158 = pneg %p157
      // Predicated region
      $region29: #{tpu_custom_call.1} parent=5 // pred_check
        _
      $region30: #{tpu_custom_call.1} parent=5 // pred_check_branch
        %160 = sbr.rel (%p157) target = $region32
      $region31: #{tpu_custom_call.1} parent=5 // pred_region
        %s161 = ssub.s32 %s15, 1
        %s162 = sand.u32 %s28, 1
        %s163 = scalar_lea.sflag [#allocation3], %s162
        %s164 = sand.u32 %s28, 1
        %s165 = smul.addr %s164, 256
        %s166 = scalar_lea.vmem [#allocation2], %s165
        // Predicated region
        $region33: #{tpu_custom_call.1} parent=31 // pred_check
          %p167 = pneg %p41
        $region34: #{tpu_custom_call.1} parent=31 // pred_check_branch
          %169 = sbr.rel (%p167) target = $region36
        $region35: #{tpu_custom_call.1} parent=31 // pred_region
          %170 = dma.done %s163, 4096
        $region36: #{tpu_custom_call.1} parent=31 // pred_fallthru
          _
        %s171 = sand.u32 %s28, 1
        %s172 = scalar_lea.sflag [#allocation3], %s171
        %s173 = sand.u32 %s28, 1
        %s174 = smul.addr %s173, 256
        %s175 = scalar_lea.vmem [#allocation2], %s174
        %p176 = pneg %p41
        %p177 = pneg %p38
        %p178 = pneg %p62
        %p179 = pneg %p59
        %p180 = pneg %p83
        %p181 = pneg %p80
        %p182 = pneg %p109
        %p183 = pneg %p106
        %s184 = sand.u32 %s96, 1
        %s185 = scalar_lea.sflag [#allocation4], %s184
        %s186 = sand.u32 %s96, 1
        %s187 = smul.addr %s186, 256
        %s188 = scalar_lea.vmem [#allocation5], %s187
        %s189 = smul.u32 32, %s20
        %s190 = smul.u32 32, %s20
        %v191 = vld [vmem:[%s166] sm:$0xff]
        %v192 = vld [vmem:[%s166 + $0x8] sm:$0xff]
        %v193 = vld [vmem:[%s166 + $0x10] sm:$0xff]
        %v194 = vld [vmem:[%s166 + $0x18] sm:$0xff]
        %v195 = vld [vmem:[%s166 + $0x20] sm:$0xff]
        %v196 = vld [vmem:[%s166 + $0x28] sm:$0xff]
        %v197 = vld [vmem:[%s166 + $0x30] sm:$0xff]
        %v198 = vld [vmem:[%s166 + $0x38] sm:$0xff]
        %v199 = vld [vmem:[%s166 + $0x40] sm:$0xff]
        %v200 = vld [vmem:[%s166 + $0x48] sm:$0xff]
        %v201 = vld [vmem:[%s166 + $0x50] sm:$0xff]
        %v202 = vld [vmem:[%s166 + $0x58] sm:$0xff]
        %v203 = vld [vmem:[%s166 + $0x60] sm:$0xff]
        %v204 = vld [vmem:[%s166 + $0x68] sm:$0xff]
        %v205 = vld [vmem:[%s166 + $0x70] sm:$0xff]
        %v206 = vld [vmem:[%s166 + $0x78] sm:$0xff]
        %v207 = vld [vmem:[%s166 + $0x80] sm:$0xff]
        %v208 = vld [vmem:[%s166 + $0x88] sm:$0xff]
        %v209 = vld [vmem:[%s166 + $0x90] sm:$0xff]
        %v210 = vld [vmem:[%s166 + $0x98] sm:$0xff]
        %v211 = vld [vmem:[%s166 + $0xa0] sm:$0xff]
        %v212 = vld [vmem:[%s166 + $0xa8] sm:$0xff]
        %v213 = vld [vmem:[%s166 + $0xb0] sm:$0xff]
        %v214 = vld [vmem:[%s166 + $0xb8] sm:$0xff]
        %v215 = vld [vmem:[%s166 + $0xc0] sm:$0xff]
        %v216 = vld [vmem:[%s166 + $0xc8] sm:$0xff]
        %v217 = vld [vmem:[%s166 + $0xd0] sm:$0xff]
        %v218 = vld [vmem:[%s166 + $0xd8] sm:$0xff]
        %v219 = vld [vmem:[%s166 + $0xe0] sm:$0xff]
        %v220 = vld [vmem:[%s166 + $0xe8] sm:$0xff]
        %v221 = vld [vmem:[%s166 + $0xf0] sm:$0xff]
        %v222 = vld [vmem:[%s166 + $0xf8] sm:$0xff]
        %v223 = vld [vmem:[%s1] sm:$0x1]
        %v225 = vlaneseq
        %v226 = vshrl.u32 %v225, 7
        %v227 = vsub.s32 0, %v226
        %v228 = vrot.slane %v223, %v227
        %v230 = vmul.f32 %v191, %v228
        %v231 = vmul.f32 %v192, %v228
        %v232 = vmul.f32 %v193, %v228
        %v233 = vmul.f32 %v194, %v228
        %v234 = vmul.f32 %v195, %v228
        %v235 = vmul.f32 %v196, %v228
        %v236 = vmul.f32 %v197, %v228
        %v237 = vmul.f32 %v198, %v228
        %v238 = vmul.f32 %v199, %v228
        %v239 = vmul.f32 %v200, %v228
        %v240 = vmul.f32 %v201, %v228
        %v241 = vmul.f32 %v202, %v228
        %v242 = vmul.f32 %v203, %v228
        %v243 = vmul.f32 %v204, %v228
        %v244 = vmul.f32 %v205, %v228
        %v245 = vmul.f32 %v206, %v228
        %v246 = vmul.f32 %v207, %v228
        %v247 = vmul.f32 %v208, %v228
        %v248 = vmul.f32 %v209, %v228
        %v249 = vmul.f32 %v210, %v228
        %v250 = vmul.f32 %v211, %v228
        %v251 = vmul.f32 %v212, %v228
        %v252 = vmul.f32 %v213, %v228
        %v253 = vmul.f32 %v214, %v228
        %v254 = vmul.f32 %v215, %v228
        %v255 = vmul.f32 %v216, %v228
        %v256 = vmul.f32 %v217, %v228
        %v257 = vmul.f32 %v218, %v228
        %v258 = vmul.f32 %v219, %v228
        %v259 = vmul.f32 %v220, %v228
        %v260 = vmul.f32 %v221, %v228
        %v261 = vmul.f32 %v222, %v228
        %v262 = vld [vmem:[%s2] sm:$0x1]
        %v264 = vlaneseq
        %v265 = vshrl.u32 %v264, 7
        %v266 = vsub.s32 0, %v265
        %v267 = vrot.slane %v262, %v266
        %v269 = vadd.f32 %v230, %v267
        %v270 = vadd.f32 %v231, %v267
        %v271 = vadd.f32 %v232, %v267
        %v272 = vadd.f32 %v233, %v267
        %v273 = vadd.f32 %v234, %v267
        %v274 = vadd.f32 %v235, %v267
        %v275 = vadd.f32 %v236, %v267
        %v276 = vadd.f32 %v237, %v267
        %v277 = vadd.f32 %v238, %v267
        %v278 = vadd.f32 %v239, %v267
        %v279 = vadd.f32 %v240, %v267
        %v280 = vadd.f32 %v241, %v267
        %v281 = vadd.f32 %v242, %v267
        %v282 = vadd.f32 %v243, %v267
        %v283 = vadd.f32 %v244, %v267
        %v284 = vadd.f32 %v245, %v267
        %v285 = vadd.f32 %v246, %v267
        %v286 = vadd.f32 %v247, %v267
        %v287 = vadd.f32 %v248, %v267
        %v288 = vadd.f32 %v249, %v267
        %v289 = vadd.f32 %v250, %v267
        %v290 = vadd.f32 %v251, %v267
        %v291 = vadd.f32 %v252, %v267
        %v292 = vadd.f32 %v253, %v267
        %v293 = vadd.f32 %v254, %v267
        %v294 = vadd.f32 %v255, %v267
        %v295 = vadd.f32 %v256, %v267
        %v296 = vadd.f32 %v257, %v267
        %v297 = vadd.f32 %v258, %v267
        %v298 = vadd.f32 %v259, %v267
        %v299 = vadd.f32 %v260, %v267
        %v300 = vadd.f32 %v261, %v267
        %v301 = vmax.f32 %v269, 0.0
        %v302 = vmax.f32 %v270, 0.0
        %v303 = vmax.f32 %v271, 0.0
        %v304 = vmax.f32 %v272, 0.0
        %v305 = vmax.f32 %v273, 0.0
        %v306 = vmax.f32 %v274, 0.0
        %v307 = vmax.f32 %v275, 0.0
        %v308 = vmax.f32 %v276, 0.0
        %v309 = vmax.f32 %v277, 0.0
        %v310 = vmax.f32 %v278, 0.0
        %v311 = vmax.f32 %v279, 0.0
        %v312 = vmax.f32 %v280, 0.0
        %v313 = vmax.f32 %v281, 0.0
        %v314 = vmax.f32 %v282, 0.0
        %v315 = vmax.f32 %v283, 0.0
        %v316 = vmax.f32 %v284, 0.0
        %v317 = vmax.f32 %v285, 0.0
        %v318 = vmax.f32 %v286, 0.0
        %v319 = vmax.f32 %v287, 0.0
        %v320 = vmax.f32 %v288, 0.0
        %v321 = vmax.f32 %v289, 0.0
        %v322 = vmax.f32 %v290, 0.0
        %v323 = vmax.f32 %v291, 0.0
        %v324 = vmax.f32 %v292, 0.0
        %v325 = vmax.f32 %v293, 0.0
        %v326 = vmax.f32 %v294, 0.0
        %v327 = vmax.f32 %v295, 0.0
        %v328 = vmax.f32 %v296, 0.0
        %v329 = vmax.f32 %v297, 0.0
        %v330 = vmax.f32 %v298, 0.0
        %v331 = vmax.f32 %v299, 0.0
        %v332 = vmax.f32 %v300, 0.0
        %333 = vst [vmem:[%s188] sm:$0xff] %v301
        %334 = vst [vmem:[%s188 + $0x8] sm:$0xff] %v302
        %335 = vst [vmem:[%s188 + $0x10] sm:$0xff] %v303
        %336 = vst [vmem:[%s188 + $0x18] sm:$0xff] %v304
        %337 = vst [vmem:[%s188 + $0x20] sm:$0xff] %v305
        %338 = vst [vmem:[%s188 + $0x28] sm:$0xff] %v306
        %339 = vst [vmem:[%s188 + $0x30] sm:$0xff] %v307
        %340 = vst [vmem:[%s188 + $0x38] sm:$0xff] %v308
        %341 = vst [vmem:[%s188 + $0x40] sm:$0xff] %v309
        %342 = vst [vmem:[%s188 + $0x48] sm:$0xff] %v310
        %343 = vst [vmem:[%s188 + $0x50] sm:$0xff] %v311
        %344 = vst [vmem:[%s188 + $0x58] sm:$0xff] %v312
        %345 = vst [vmem:[%s188 + $0x60] sm:$0xff] %v313
        %346 = vst [vmem:[%s188 + $0x68] sm:$0xff] %v314
        %347 = vst [vmem:[%s188 + $0x70] sm:$0xff] %v315
        %348 = vst [vmem:[%s188 + $0x78] sm:$0xff] %v316
        %349 = vst [vmem:[%s188 + $0x80] sm:$0xff] %v317
        %350 = vst [vmem:[%s188 + $0x88] sm:$0xff] %v318
        %351 = vst [vmem:[%s188 + $0x90] sm:$0xff] %v319
        %352 = vst [vmem:[%s188 + $0x98] sm:$0xff] %v320
        %353 = vst [vmem:[%s188 + $0xa0] sm:$0xff] %v321
        %354 = vst [vmem:[%s188 + $0xa8] sm:$0xff] %v322
        %355 = vst [vmem:[%s188 + $0xb0] sm:$0xff] %v323
        %356 = vst [vmem:[%s188 + $0xb8] sm:$0xff] %v324
        %357 = vst [vmem:[%s188 + $0xc0] sm:$0xff] %v325
        %358 = vst [vmem:[%s188 + $0xc8] sm:$0xff] %v326
        %359 = vst [vmem:[%s188 + $0xd0] sm:$0xff] %v327
        %360 = vst [vmem:[%s188 + $0xd8] sm:$0xff] %v328
        %361 = vst [vmem:[%s188 + $0xe0] sm:$0xff] %v329
        %362 = vst [vmem:[%s188 + $0xe8] sm:$0xff] %v330
        %363 = vst [vmem:[%s188 + $0xf0] sm:$0xff] %v331
        %364 = vst [vmem:[%s188 + $0xf8] sm:$0xff] %v332
        %s365 = sand.u32 %s96, 1
        %s366 = scalar_lea.sflag [#allocation4], %s365
        %s367 = sand.u32 %s96, 1
        %s368 = smul.addr %s367, 256
        %s369 = scalar_lea.vmem [#allocation5], %s368
        // Predicated region
        $region37: #{tpu_custom_call.1} parent=31 // pred_check
          %p370 = pneg %p106
        $region38: #{tpu_custom_call.1} parent=31 // pred_check_branch
          %372 = sbr.rel (%p370) target = $region40
        $region39: #{tpu_custom_call.1} parent=31 // pred_region
          %s373 = smul.u32 32, %s20
          %s375 = ssub.s32 4096, 4096
          %376 = vsyncadd %s366, %s375
          %s377 = smul.addr %s373, 128
          %s378 = scalar_lea.hbm %s3, %s377
          %s379 = sshll.u32 %s369, 4
          %s380 = int_to_ptr.vmem [resolvable:$true] %s379
          %385 = dma.vmem_to_hbm [thread:$0]  %s380, 4096, %s378, %s366, 128, 128, 8
        $region40: #{tpu_custom_call.1} parent=31 // pred_fallthru
          _
      $region32: #{tpu_custom_call.1} parent=5 // pred_fallthru
        _
      %p386 = scmp.le.s32.totalorder 2, %s15
      // Predicated region
      $region41: #{tpu_custom_call.1} parent=5 // pred_check
        %p387 = pneg %p386
      $region42: #{tpu_custom_call.1} parent=5 // pred_check_branch
        %389 = sbr.rel (%p387) target = $region44
      $region43: #{tpu_custom_call.1} parent=5 // pred_region
        %s390 = ssub.s32 %s15, 2
        // Predicated region
        $region45: #{tpu_custom_call.1} parent=43 // pred_check
          %p391 = pneg %p112
        $region46: #{tpu_custom_call.1} parent=43 // pred_check_branch
          %393 = sbr.rel (%p391) target = $region48
        $region47: #{tpu_custom_call.1} parent=43 // pred_region
          %s394 = sand.u32 %s97, 1
          %s395 = scalar_lea.sflag [#allocation4], %s394
          %s396 = sand.u32 %s97, 1
          %s397 = smul.addr %s396, 256
          %s398 = scalar_lea.vmem [#allocation5], %s397
          %399 = dma.done %s395, 4096
        $region48: #{tpu_custom_call.1} parent=43 // pred_fallthru
          _
      $region44: #{tpu_custom_call.1} parent=5 // pred_fallthru
        _
    $region6: #{tpu_custom_call.1} parent=1 // loop_footer
      %s19 = sadd.s32 1, %s15
    $region7: #{tpu_custom_call.1} parent=1 // loop_footer_branch
      %14 = sbr.rel target = $region3
    $region8: #{tpu_custom_call.1} parent=1 // loop_exit
      _
    %400 = vsyncpa [#allocation3], 1
    %s401 = scalar_lea.sflag [#allocation3], 1
    %402 = vsyncpa %s401, 1
    %403 = vsyncpa [#allocation4], 1
    %s404 = scalar_lea.sflag [#allocation4], 1
    %405 = vsyncpa %s404, 1

</llo_original>
